<compile_context>
chip_gen: v7x
topology: tpu7x:2x2x1
jax: 0.10.0
libtpu: 0.0.40
codegen_flags: <defaults>
</compile_context>

<pallas_src>
import functools

import jax
import jax.numpy as jnp
from jax import lax
from jax.experimental import pallas as pl
from jax.experimental.pallas import tpu as pltpu


def _distance_loss_kernel(tbf, rp, tail_rows,
                          c1_obj_ref, c1_pred_ref, mask_ref,
                          obj_ref, pred_ref, out_q_ref, out_a_ref):
    """One grid step: lane-dense partial sums of mask * x * (x - c1)."""
    mask = mask_ref[...]                       # (rp, 128): 1.0 at s==1 lanes

    def block_partial(x_ref, c1_ref, row_valid):
        x = x_ref[...].astype(jnp.float32)     # (tbf, 128) streamed rows
        c1 = c1_ref[...]                       # (rp, 128) resident constant
        if rp == 1:
            sq = (mask * x) * (x - c1)         # 3 VALU ops per vreg
        else:
            x3 = x.reshape(tbf // rp, rp, 128)
            sq = ((mask * x3) * (x3 - c1)).reshape(tbf, 128)
        if row_valid is not None:              # last partial block only
            sq = jnp.where(row_valid, sq, 0.0)
        return jnp.sum(sq, axis=0, keepdims=True).reshape(1, 1, 128)

    def emit(row_valid):
        out_q_ref[...] = block_partial(obj_ref, c1_obj_ref, row_valid)
        out_a_ref[...] = block_partial(pred_ref, c1_pred_ref, row_valid)

    if tail_rows == 0:
        emit(None)                             # every block is full: no mask
    else:
        i = pl.program_id(0)
        last = pl.num_programs(0) - 1

        @pl.when(i < last)
        def _full_blocks():
            emit(None)

        @pl.when(i == last)
        def _tail_block():
            rows = lax.broadcasted_iota(jnp.int32, (tbf, 1), 0)
            emit(rows < tail_rows)


def distance_loss(pred, label, obj_emb, gamma: float, *, max_block_rows: int = 4096):
    """Pallas TPU forward of DistanceLoss. `label` is unused by the module."""
    del label  # unused by the forward pass, kept for signature parity
    assert pred.shape == obj_emb.shape, "pred / obj_emb shape mismatch"
    B, S, D = pred.shape
    assert S == 2, "broadcast in the reference forward is only valid for S == 2"

    f32 = jnp.float32
    P = S * D                                   # flattened per-batch length
    if P <= 128:
        if 128 % P != 0:
            # TODO(synk): general D needs a drifting lane pattern (period
            # lcm(P,128)); only 2*D | 128 or 128 | 2*D is implemented.
            raise NotImplementedError(f"unsupported embedding dim D={D}")
        rp = 1
    else:
        if P % 128 != 0:
            raise NotImplementedError(f"unsupported embedding dim D={D}")
        rp = P // 128
    reps = (rp * 128) // P                      # batch rows per lane period

    total = B * P
    R = -(-total // 128)                        # lane-dense rows (after pad)

    def to_lane_rows(x):
        flat = x.reshape(-1)                    # zero-copy for contiguous input
        pad = R * 128 - total
        if pad:
            # TODO(synk): zero-padding materializes one copy; only hit when
            # B*S*D is not a multiple of 128 (odd batch sizes). Zero rows
            # contribute exactly 0 to the masked partial sums.
            flat = jnp.pad(flat, (0, pad))
        return flat.reshape(R, 128)

    obj_rows = to_lane_rows(obj_emb)
    pred_rows = to_lane_rows(pred)

    # Tiny resident lane constants, built from the (S, D) row-0 slices only.
    obj0 = obj_emb[0].astype(f32)               # (2, D)
    pred0 = pred[0].astype(f32)                 # (2, D)

    def lane_consts(x0):
        c1 = x0[0] + x0[1]                                        # (D,)
        per = jnp.concatenate([jnp.zeros((D,), f32), c1])         # (P,)
        return jnp.tile(per, reps).reshape(rp, 128)

    c1_obj = lane_consts(obj0)
    c1_pred = lane_consts(pred0)
    mask_per = jnp.concatenate([jnp.zeros((D,), f32), jnp.ones((D,), f32)])
    lane_mask = jnp.tile(mask_per, reps).reshape(rp, 128)

    # Block sizing: full extent if it fits (always legal), else aligned tiles.
    granule = 8 * rp
    if R <= max_block_rows:
        tbf = R
    else:
        tbf = (max_block_rows // granule) * granule
        assert tbf >= granule, "max_block_rows too small for this shape"
    n_blocks = -(-R // tbf)
    tail_rows = R % tbf                          # 0 -> no row masking anywhere

    kernel = functools.partial(_distance_loss_kernel, tbf, rp, tail_rows)

    stream_kwargs = {}
    if n_blocks >= 3:
        stream_kwargs = dict(pipeline_mode=pl.Buffered(3))   # hide DMA jitter
    const_spec = pl.BlockSpec((rp, 128), lambda i: (0, 0))
    stream_spec = pl.BlockSpec((tbf, 128), lambda i: (i, 0), **stream_kwargs)
    out_spec = pl.BlockSpec((1, 1, 128), lambda i: (i, 0, 0))

    itemsize = jnp.dtype(pred.dtype).itemsize
    cost = pl.CostEstimate(
        flops=int(8 * R * 128),
        transcendentals=0,
        bytes_accessed=int(2 * R * 128 * itemsize + 3 * rp * 128 * 4
                           + 2 * n_blocks * 128 * 4))

    out_q, out_a = pl.pallas_call(
        kernel,
        out_shape=(jax.ShapeDtypeStruct((n_blocks, 1, 128), f32),
                   jax.ShapeDtypeStruct((n_blocks, 1, 128), f32)),
        grid_spec=pltpu.PrefetchScalarGridSpec(
            num_scalar_prefetch=0,
            grid=(n_blocks,),
            in_specs=[const_spec, const_spec, const_spec,
                      stream_spec, stream_spec],
            out_specs=[out_spec, out_spec],
        ),
        compiler_params=pltpu.CompilerParams(
            dimension_semantics=("parallel",),
            vmem_limit_bytes=32 * 1024 * 1024,
        ),
        cost_estimate=cost,
    )(c1_obj, c1_pred, lane_mask, obj_rows, pred_rows)

    # Tiny wrapper epilogue: close the algebraic rewrite and clamp.
    #   sum_s (x - x0[s])^2 = 2*x*(x - (x0[0]+x0[1])) + (x0[0]^2 + x0[1]^2)
    inv_n = 1.0 / float(B * S * D)
    c2_obj = jnp.sum(obj0 * obj0)
    c2_pred = jnp.sum(pred0 * pred0)
    q_total = 2.0 * jnp.sum(out_q) + B * c2_obj
    a_total = 2.0 * jnp.sum(out_a) + B * c2_pred
    # -(query_loss - ans_loss) == ans_loss - query_loss ; clamp at gamma.
    return jnp.minimum(jnp.float32(gamma), (a_total - q_total) * inv_n)


def _reference(pred, label, obj_emb, gamma):
    del label
    q = obj_emb[:, 1:] - obj_emb[0, :]
    a = pred[:, 1:] - pred[0, :]
    query_loss = jnp.mean(q * q)
    ans_loss = jnp.mean(a * a)
    return jnp.minimum(gamma, -(query_loss - ans_loss))


if __name__ == "__main__":
    gamma = 0.5  # deterministic hyper-parameter (module has no learned weights)
    S, D = 2, 32

    def make(bkey, B):
        k1, k2, k3 = jax.random.split(bkey, 3)
        p = jax.random.normal(k1, (B, S, D), dtype=jnp.float32)
        l = jax.random.normal(k2, (B, S, D), dtype=jnp.float32)  # unused
        o = jax.random.normal(k3, (B, S, D), dtype=jnp.float32)
        return p, l, o

    k_a, k_b, k_c = jax.random.split(jax.random.PRNGKey(0), 3)

    # Case 1: small single-block fast path (B=8 -> 4 lane-dense rows).
    pred, label, obj = make(k_a, 8)
    out = jax.block_until_ready(distance_loss(pred, label, obj, gamma))
    ref = _reference(pred, label, obj, gamma)
    assert jnp.allclose(out, ref, rtol=5e-5, atol=5e-5), (out, ref)

    # Case 2: multi-block 'parallel' grid with a masked tail block and
    # Buffered(3) streams (20 rows @ 8 rows/block -> 3 blocks, tail of 4).
    pred2, label2, obj2 = make(k_b, 40)
    out2 = jax.block_until_ready(
        distance_loss(pred2, label2, obj2, gamma, max_block_rows=8))
    ref2 = _reference(pred2, label2, obj2, gamma)
    assert jnp.allclose(out2, ref2, rtol=5e-5, atol=5e-5), (out2, ref2)

    # Case 3: odd batch (B*S*D not a multiple of 128) -> zero-padded lane rows.
    pred3, label3, obj3 = make(k_c, 7)
    out3 = jax.block_until_ready(distance_loss(pred3, label3, obj3, gamma))
    ref3 = _reference(pred3, label3, obj3, gamma)
    assert jnp.allclose(out3, ref3, rtol=5e-5, atol=5e-5), (out3, ref3)

    print("KERNEL_OK")
</pallas_src>

<mosaic_0001>
module attributes {stable_mosaic.version = 11 : i64} {
  func.func @_distance_loss_kernel(%arg0: i32, %arg1: memref<1x128xf32, #tpu.memory_space<vmem>>, %arg2: memref<1x128xf32, #tpu.memory_space<vmem>>, %arg3: memref<1x128xf32, #tpu.memory_space<vmem>>, %arg4: memref<4x128xf32, #tpu.memory_space<vmem>>, %arg5: memref<4x128xf32, #tpu.memory_space<vmem>>, %arg6: memref<1x1x128xf32, #tpu.memory_space<vmem>>, %arg7: memref<1x1x128xf32, #tpu.memory_space<vmem>>) attributes {dimension_semantics = [#tpu.dimension_semantics<parallel>], iteration_bounds = array<i64: 1>, scalar_prefetch = 0 : i64, scratch_operands = 0 : i64, tpu.core_type = #tpu.core_type<tc>, window_params = [{pipeline_mode = #tpu.pipeline_mode<synchronous>, transform_indices = @transform_0, window_bounds = array<i64: 1, 128>}, {pipeline_mode = #tpu.pipeline_mode<synchronous>, transform_indices = @transform_1, window_bounds = array<i64: 1, 128>}, {pipeline_mode = #tpu.pipeline_mode<synchronous>, transform_indices = @transform_2, window_bounds = array<i64: 1, 128>}, {transform_indices = @transform_3, window_bounds = array<i64: 4, 128>}, {transform_indices = @transform_4, window_bounds = array<i64: 4, 128>}, {transform_indices = @transform_5, window_bounds = array<i64: 1, 1, 128>}, {transform_indices = @transform_6, window_bounds = array<i64: 1, 1, 128>}]} {
    %c0 = arith.constant 0 : index
    %c0_0 = arith.constant 0 : index
    %0 = vector.load %arg3[%c0, %c0_0] : memref<1x128xf32, #tpu.memory_space<vmem>>, vector<1x128xf32>
    %c0_1 = arith.constant 0 : index
    %c0_2 = arith.constant 0 : index
    %1 = vector.load %arg4[%c0_1, %c0_2] : memref<4x128xf32, #tpu.memory_space<vmem>>, vector<4x128xf32>
    %c0_3 = arith.constant 0 : index
    %c0_4 = arith.constant 0 : index
    %2 = vector.load %arg1[%c0_3, %c0_4] : memref<1x128xf32, #tpu.memory_space<vmem>>, vector<1x128xf32>
    %3 = vector.broadcast %0 : vector<1x128xf32> to vector<4x128xf32>
    %4 = arith.mulf %3, %1 : vector<4x128xf32>
    %5 = vector.broadcast %2 : vector<1x128xf32> to vector<4x128xf32>
    %6 = arith.subf %1, %5 : vector<4x128xf32>
    %7 = arith.mulf %4, %6 : vector<4x128xf32>
    %cst = arith.constant dense<0.000000e+00> : vector<128xf32>
    %8 = vector.multi_reduction <add>, %7, %cst [0] : vector<4x128xf32> to vector<128xf32>
    %9 = vector.shape_cast %8 : vector<128xf32> to vector<1x128xf32>
    %10 = vector.shape_cast %9 : vector<1x128xf32> to vector<1x1x128xf32>
    %c0_5 = arith.constant 0 : index
    %c0_6 = arith.constant 0 : index
    %c0_7 = arith.constant 0 : index
    %11 = vector.load %arg6[%c0_5, %c0_6, %c0_7] : memref<1x1x128xf32, #tpu.memory_space<vmem>>, vector<1x1x128xf32>
    tpu.vector_store %arg6[%c0_5, %c0_6, %c0_7], %10 {strides = array<i32>} : memref<1x1x128xf32, #tpu.memory_space<vmem>>, vector<1x1x128xf32>,
    %c0_8 = arith.constant 0 : index
    %c0_9 = arith.constant 0 : index
    %12 = vector.load %arg5[%c0_8, %c0_9] : memref<4x128xf32, #tpu.memory_space<vmem>>, vector<4x128xf32>
    %c0_10 = arith.constant 0 : index
    %c0_11 = arith.constant 0 : index
    %13 = vector.load %arg2[%c0_10, %c0_11] : memref<1x128xf32, #tpu.memory_space<vmem>>, vector<1x128xf32>
    %14 = vector.broadcast %0 : vector<1x128xf32> to vector<4x128xf32>
    %15 = arith.mulf %14, %12 : vector<4x128xf32>
    %16 = vector.broadcast %13 : vector<1x128xf32> to vector<4x128xf32>
    %17 = arith.subf %12, %16 : vector<4x128xf32>
    %18 = arith.mulf %15, %17 : vector<4x128xf32>
    %cst_12 = arith.constant dense<0.000000e+00> : vector<128xf32>
    %19 = vector.multi_reduction <add>, %18, %cst_12 [0] : vector<4x128xf32> to vector<128xf32>
    %20 = vector.shape_cast %19 : vector<128xf32> to vector<1x128xf32>
    %21 = vector.shape_cast %20 : vector<1x128xf32> to vector<1x1x128xf32>
    %c0_13 = arith.constant 0 : index
    %c0_14 = arith.constant 0 : index
    %c0_15 = arith.constant 0 : index
    %22 = vector.load %arg7[%c0_13, %c0_14, %c0_15] : memref<1x1x128xf32, #tpu.memory_space<vmem>>, vector<1x1x128xf32>
    tpu.vector_store %arg7[%c0_13, %c0_14, %c0_15], %21 {strides = array<i32>} : memref<1x1x128xf32, #tpu.memory_space<vmem>>, vector<1x1x128xf32>,
    return
  }
  func.func @transform_0(%arg0: i32) -> (i32, i32) {
    %c0_i32 = arith.constant 0 : i32
    %c0_i32_0 = arith.constant 0 : i32
    %c0_i32_1 = arith.constant 0 : i32
    return %c0_i32, %c0_i32_0 : i32, i32
  }
  func.func @transform_1(%arg0: i32) -> (i32, i32) {
    %c0_i32 = arith.constant 0 : i32
    %c0_i32_0 = arith.constant 0 : i32
    %c0_i32_1 = arith.constant 0 : i32
    return %c0_i32, %c0_i32_0 : i32, i32
  }
  func.func @transform_2(%arg0: i32) -> (i32, i32) {
    %c0_i32 = arith.constant 0 : i32
    %c0_i32_0 = arith.constant 0 : i32
    %c0_i32_1 = arith.constant 0 : i32
    return %c0_i32, %c0_i32_0 : i32, i32
  }
  func.func @transform_3(%arg0: i32) -> (i32, i32) {
    %c0_i32 = arith.constant 0 : i32
    %c0_i32_0 = arith.constant 0 : i32
    return %arg0, %c0_i32 : i32, i32
  }
  func.func @transform_4(%arg0: i32) -> (i32, i32) {
    %c0_i32 = arith.constant 0 : i32
    %c0_i32_0 = arith.constant 0 : i32
    return %arg0, %c0_i32 : i32, i32
  }
  func.func @transform_5(%arg0: i32) -> (i32, i32, i32) {
    %c0_i32 = arith.constant 0 : i32
    %c0_i32_0 = arith.constant 0 : i32
    %c0_i32_1 = arith.constant 0 : i32
    return %arg0, %c0_i32, %c0_i32_0 : i32, i32, i32
  }
  func.func @transform_6(%arg0: i32) -> (i32, i32, i32) {
    %c0_i32 = arith.constant 0 : i32
    %c0_i32_0 = arith.constant 0 : i32
    %c0_i32_1 = arith.constant 0 : i32
    return %arg0, %c0_i32, %c0_i32_0 : i32, i32, i32
  }
}

</mosaic_0001>

<llo_original>
// kernel: tpu_custom_call.1
$region0: #{tpu_custom_call.1}
  #allocation0 [shape = 'u32[]', space=smem, size = 0x4, offset = 0x4, fixed_abs, tag = 'smem constant byte address 0x4 - core index']
  #allocation1 [shape = 'u32[144,128]{1,0:T(1,128)}', space=vmem, size = 0x12000, scoped, tag = 'internal scratch']
  %s0 = inlined_call_operand.hbm [shape: f32[1,128], index: 0, kind: input, shape index: {}]
  %s1 = inlined_call_operand.vmem [shape: f32[1,128], index: 1, kind: input, shape index: {}]
  %s2 = inlined_call_operand.vmem [shape: f32[1,128], index: 2, kind: input, shape index: {}]
  %s3 = inlined_call_operand.vmem [shape: f32[4,128], index: 3, kind: input, shape index: {}]
  %s4 = inlined_call_operand.vmem [shape: f32[4,128], index: 4, kind: input, shape index: {}]
  %s5 = inlined_call_operand.hbm [shape: f32[1,1,128], index: 5, kind: output, shape index: {0}]
  %s6 = inlined_call_operand.hbm [shape: f32[1,1,128], index: 6, kind: output, shape index: {1}]
  %7 = xla_tuple %s5, %s6
  %s8 = sld [smem:[#allocation0]]
  $region42: #{tpu_custom_call.1} parent=0
    _
  %s10 = ssub.s32 1, %s8
  %s11 = scalar_select 0, %s10, %s8
  $region1: #{tpu_custom_call.1} parent=0
    #allocation2 [shape = 'u8[512]{0}', space=vmem, size = 0x400, scoped, tag = 'input window, operand 0, single buffered']
    #allocation3 [shape = 's32[1]{0}', space=sflag, size = 0x4, scoped, tag = 'scoped memory for tpu_custom_call.1']
    #allocation4 [shape = 's32[1]{0}', space=sflag, size = 0x4, scoped, tag = 'scoped memory for tpu_custom_call.1']
    #allocation5 [shape = 'u8[512]{0}', space=vmem, size = 0x400, scoped, tag = 'output window, operand 0, single buffered']
    #allocation6 [shape = 'u8[512]{0}', space=vmem, size = 0x400, scoped, tag = 'output window, operand 1, single buffered']
    #allocation7 [shape = 's32[1]{0}', space=sflag, size = 0x4, scoped, tag = 'scoped memory for tpu_custom_call.1']
    %12 = vsyncpa [#allocation3], 0
    %13 = vsyncpa [#allocation4], 0
    %14 = vsyncpa [#allocation7], 0
    // Predicated region
    $region2: #{tpu_custom_call.1} parent=1 // pred_check
      _
    $region3: #{tpu_custom_call.1} parent=1 // pred_check_branch
      %16 = sbr.rel (0) target = $region5
    $region4: #{tpu_custom_call.1} parent=1 // pred_region
      %s18 = ssub.s32 16, 16
      %19 = vsyncadd [#allocation3], %s18
      %s21 = sshll.u32 [#allocation2], 4
      %s22 = int_to_ptr.vmem [resolvable:$true] %s21
      %24 = dma.hbm_to_vmem [thread:$0]  %s0, 16, %s22, [#allocation3]
    $region5: #{tpu_custom_call.1} parent=1 // pred_fallthru
      _
    // Predicated region
    $region6: #{tpu_custom_call.1} parent=1 // pred_check
      _
    $region7: #{tpu_custom_call.1} parent=1 // pred_check_branch
      %26 = sbr.rel (0) target = $region9
    $region8: #{tpu_custom_call.1} parent=1 // pred_region
      _
    $region9: #{tpu_custom_call.1} parent=1 // pred_fallthru
      _
    // Predicated region
    $region10: #{tpu_custom_call.1} parent=1 // pred_check
      _
    $region11: #{tpu_custom_call.1} parent=1 // pred_check_branch
      %28 = sbr.rel (0) target = $region13
    $region12: #{tpu_custom_call.1} parent=1 // pred_region
      _
    $region13: #{tpu_custom_call.1} parent=1 // pred_fallthru
      _
    // Predicated region
    $region14: #{tpu_custom_call.1} parent=1 // pred_check
      _
    $region15: #{tpu_custom_call.1} parent=1 // pred_check_branch
      %30 = sbr.rel (0) target = $region17
    $region16: #{tpu_custom_call.1} parent=1 // pred_region
      _
    $region17: #{tpu_custom_call.1} parent=1 // pred_fallthru
      _
    // Predicated region
    $region18: #{tpu_custom_call.1} parent=1 // pred_check
      _
    $region19: #{tpu_custom_call.1} parent=1 // pred_check_branch
      %32 = sbr.rel (0) target = $region21
    $region20: #{tpu_custom_call.1} parent=1 // pred_region
      _
    $region21: #{tpu_custom_call.1} parent=1 // pred_fallthru
      _
    // Predicated region
    $region22: #{tpu_custom_call.1} parent=1 // pred_check
      _
    $region23: #{tpu_custom_call.1} parent=1 // pred_check_branch
      %34 = sbr.rel (0) target = $region25
    $region24: #{tpu_custom_call.1} parent=1 // pred_region
      %35 = dma.done [#allocation3], 16
    $region25: #{tpu_custom_call.1} parent=1 // pred_fallthru
      _
    %v36 = vld [vmem:[%s2] sm:$0x1]
    %v37 = vld [vmem:[%s3] sm:$0xf]
    %v38 = vld [vmem:[#allocation2] sm:$0x1]
    %v40 = vlaneseq
    %v41 = vshrl.u32 %v40, 7
    %v42 = vsub.s32 0, %v41
    %v43 = vrot.slane %v36, %v42
    %v45 = vmul.f32 %v43, %v37
    %v47 = vlaneseq
    %v48 = vshrl.u32 %v47, 7
    %v49 = vsub.s32 0, %v48
    %v50 = vrot.slane %v38, %v49
    %v52 = vsub.f32 %v37, %v50
    %v53 = vmul.f32 %v45, %v52
    %vm54 = vcmask 1043456
    %v55 = vsel %vm54, %v53, 0.0
    %v56 = vrot.slane %v55, 4
    %v57 = vadd.f32 %v55, %v56
    %v58 = vrot.slane %v57, 2
    %v59 = vadd.f32 %v57, %v58
    %v60 = vrot.slane %v59, 1
    %v61 = vadd.f32 %v59, %v60
    %62 = vst [vmem:[#allocation5] sm:$0x1] %v61
    %v63 = vld [vmem:[%s4] sm:$0xf]
    %v64 = vld [vmem:[%s1] sm:$0x1]
    %v65 = vmul.f32 %v43, %v63
    %v67 = vlaneseq
    %v68 = vshrl.u32 %v67, 7
    %v69 = vsub.s32 0, %v68
    %v70 = vrot.slane %v64, %v69
    %v72 = vsub.f32 %v63, %v70
    %v73 = vmul.f32 %v65, %v72
    %v74 = vsel %vm54, %v73, 0.0
    %v75 = vrot.slane %v74, 4
    %v76 = vadd.f32 %v74, %v75
    %v77 = vrot.slane %v76, 2
    %v78 = vadd.f32 %v76, %v77
    %v79 = vrot.slane %v78, 1
    %v80 = vadd.f32 %v78, %v79
    %81 = vst [vmem:[#allocation6] sm:$0x1] %v80
    // Predicated region
    $region26: #{tpu_custom_call.1} parent=1 // pred_check
      _
    $region27: #{tpu_custom_call.1} parent=1 // pred_check_branch
      %83 = sbr.rel (0) target = $region29
    $region28: #{tpu_custom_call.1} parent=1 // pred_region
      %s85 = ssub.s32 16, 16
      %86 = vsyncadd [#allocation4], %s85
      %s88 = sshll.u32 [#allocation5], 4
      %s89 = int_to_ptr.vmem [resolvable:$true] %s88
      %91 = dma.vmem_to_hbm [thread:$0]  %s89, 16, %s5, [#allocation4]
    $region29: #{tpu_custom_call.1} parent=1 // pred_fallthru
      _
    // Predicated region
    $region30: #{tpu_custom_call.1} parent=1 // pred_check
      _
    $region31: #{tpu_custom_call.1} parent=1 // pred_check_branch
      %93 = sbr.rel (0) target = $region33
    $region32: #{tpu_custom_call.1} parent=1 // pred_region
      %s95 = ssub.s32 16, 16
      %96 = vsyncadd [#allocation7], %s95
      %s98 = sshll.u32 [#allocation6], 4
      %s99 = int_to_ptr.vmem [resolvable:$true] %s98
      %101 = dma.vmem_to_hbm [thread:$0]  %s99, 16, %s6, [#allocation7]
    $region33: #{tpu_custom_call.1} parent=1 // pred_fallthru
      _
    // Predicated region
    $region34: #{tpu_custom_call.1} parent=1 // pred_check
      _
    $region35: #{tpu_custom_call.1} parent=1 // pred_check_branch
      %103 = sbr.rel (0) target = $region37
    $region36: #{tpu_custom_call.1} parent=1 // pred_region
      %104 = dma.done [#allocation4], 16
    $region37: #{tpu_custom_call.1} parent=1 // pred_fallthru
      _
    // Predicated region
    $region38: #{tpu_custom_call.1} parent=1 // pred_check
      _
    $region39: #{tpu_custom_call.1} parent=1 // pred_check_branch
      %106 = sbr.rel (0) target = $region41
    $region40: #{tpu_custom_call.1} parent=1 // pred_region
      %107 = dma.done [#allocation7], 16
    $region41: #{tpu_custom_call.1} parent=1 // pred_fallthru
      _
    %108 = vsyncpa [#allocation3], 1
    %109 = vsyncpa [#allocation4], 1
    %110 = vsyncpa [#allocation7], 1

</llo_original>
